<compile_context>
chip_gen: v6e
topology: v6e:2x2x1
jax: 0.10.0
libtpu: 0.0.40
codegen_flags: <defaults>
</compile_context>

<pallas_src>
import functools

import jax
import jax.numpy as jnp
from jax.experimental import pallas as pl
from jax.experimental.pallas import tpu as pltpu


# ----------------------------------------------------------------------------
# Tiling / compiler-params helpers
# ----------------------------------------------------------------------------

def _tile_lane(dim, cap=512):
    """Largest multiple of 128 that divides `dim` and is <= cap; else full dim."""
    best = None
    t = 128
    while t <= min(cap, dim):
        if dim % t == 0:
            best = t
        t += 128
    return best if best is not None else dim


def _tile_sublane(dim, cap=512):
    """Largest multiple of 8 that divides `dim` and is <= cap; else full dim."""
    best = None
    t = 8
    while t <= min(cap, dim):
        if dim % t == 0:
            best = t
        t += 8
    return best if best is not None else dim


def _head_block(d_model, d_k, cap=256):
    """Head-aligned lane block for the conv: a multiple of 128 and of d_k that
    divides d_model (so heads never split across blocks); else full d_model."""
    best = None
    t = 128
    while t <= min(cap, d_model):
        if d_model % t == 0 and t % d_k == 0:
            best = t
        t += 128
    return best if best is not None else d_model


def _compiler_params(semantics, live_bytes):
    # Explicit VMEM budget (review): never below the 32 MiB scoped default,
    # capped with headroom under v7x's 64 MiB physical VMEM.
    limit = int(max(32 * 1024 * 1024, min(64 * 1024 * 1024, 4 * live_bytes)))
    return pltpu.CompilerParams(dimension_semantics=semantics,
                                vmem_limit_bytes=limit)


# ----------------------------------------------------------------------------
# Linear (nn.Linear over the seq axis):  y = x @ w.T + b
# ----------------------------------------------------------------------------

def _linear_kernel(x_ref, wt_ref, b_ref, o_ref, acc_ref):
    @pl.when(pl.program_id(2) == 0)
    def _init():
        acc_ref[...] = jnp.zeros_like(acc_ref)

    # Weight is pre-transposed in the wrapper -> standard (M,K)@(K,N) MXU
    # contraction, no in-kernel operand transposes (review item 2).
    acc_ref[...] += jnp.dot(x_ref[...], wt_ref[...],
                            preferred_element_type=jnp.float32)

    @pl.when(pl.program_id(2) == pl.num_programs(2) - 1)
    def _finalize():
        o_ref[...] = (acc_ref[...] + b_ref[...]).astype(o_ref.dtype)


def linear_pallas(x2d, w, b):
    """PyTorch nn.Linear semantics on 2-D x: y = x @ w.T + b."""
    m, s_in = x2d.shape
    s_out = w.shape[0]

    wt = jnp.transpose(w)                 # (s_in, s_out): one tiny (S,S) transpose
    b2d = b.reshape(1, s_out)

    tm = _tile_sublane(m, 512)
    tn = _tile_lane(s_out, 512)
    tk = _tile_lane(s_in, 512)
    grid = (m // tm, s_out // tn, s_in // tk)

    live = 4 * (2 * (tm * tk + tk * tn + tn) + 3 * tm * tn)
    return pl.pallas_call(
        _linear_kernel,
        out_shape=jax.ShapeDtypeStruct((m, s_out), x2d.dtype),
        grid=grid,
        in_specs=[
            pl.BlockSpec((tm, tk), lambda i, j, k: (i, k)),
            pl.BlockSpec((tk, tn), lambda i, j, k: (k, j)),
            pl.BlockSpec((1, tn), lambda i, j, k: (0, j)),
        ],
        out_specs=pl.BlockSpec((tm, tn), lambda i, j, k: (i, j)),
        scratch_shapes=[pltpu.VMEM((tm, tn), jnp.float32)],
        compiler_params=_compiler_params(
            ("parallel", "parallel", "arbitrary"), live),
    )(x2d, wt, b2d)


# ----------------------------------------------------------------------------
# Per-head Conv1d (stride=1, "same" zero padding) on the channels-last buffer
#   z: (B, S, D) with D = num_heads * d_k;  conv length axis = S (sublane),
#   per-head channel mixing expressed as a block-diagonal (D, D) tap weight.
# ----------------------------------------------------------------------------

def _conv_kernel(x_ref, w_ref, b_ref, o_ref, acc_ref, *, ksize):
    pad = (ksize - 1) // 2
    s_len, db = acc_ref.shape
    x = x_ref[0]                                              # (S, DB)
    lpos = jax.lax.broadcasted_iota(jnp.int32, (s_len, db), 0)

    for t in range(ksize):                                    # K is tiny & static
        off = t - pad
        if off == 0:
            xt = x
        else:
            # xt[l, :] = x[l + off, :] via a sublane rotation (XLU), then mask
            # the wrapped rows to realize the zero padding (review item 3).
            xt = pltpu.roll(x, shift=(-off) % s_len, axis=0)
            xt = jnp.where((lpos + off >= 0) & (lpos + off < s_len), xt, 0.0)
        p = jnp.dot(xt, w_ref[t], preferred_element_type=jnp.float32)
        if t == 0:
            acc_ref[...] = p                                   # VMEM accumulator
        else:
            acc_ref[...] += p

    o_ref[0] = (acc_ref[...] + b_ref[...]).astype(o_ref.dtype)


def conv1d_heads_pallas(z, conv_w, conv_b, num_heads):
    """nn.Conv1d applied per head on z: (B, S, D); conv_w: (d_k, d_k, K)."""
    bsz, s_len, d_model = z.shape
    d_k = conv_w.shape[0]
    ksize = conv_w.shape[-1]

    # Block-diagonal per-tap weight (K, D, D): one lane-dense matmul mixes all
    # heads in a block at once; zero cross-head blocks keep per-head semantics
    # exact.  Bias is tiled across heads.
    eye_h = jnp.eye(num_heads, dtype=conv_w.dtype)
    w_bd = jnp.stack(
        [jnp.kron(eye_h, conv_w[:, :, t].T) for t in range(ksize)])   # (K, D, D)
    b_full = jnp.tile(conv_b, num_heads).reshape(1, d_model)

    db = _head_block(d_model, d_k)
    grid = (bsz, d_model // db)

    live = 4 * (4 * s_len * db + 2 * ksize * db * db + s_len * db + 2 * db)
    kernel = functools.partial(_conv_kernel, ksize=ksize)
    return pl.pallas_call(
        kernel,
        out_shape=jax.ShapeDtypeStruct((bsz, s_len, d_model), z.dtype),
        grid=grid,
        in_specs=[
            pl.BlockSpec((1, s_len, db), lambda b, j: (b, 0, j)),
            pl.BlockSpec((ksize, db, db), lambda b, j: (0, j, j)),  # diag crop
            pl.BlockSpec((1, db), lambda b, j: (0, j)),
        ],
        out_specs=pl.BlockSpec((1, s_len, db), lambda b, j: (b, 0, j)),
        scratch_shapes=[pltpu.VMEM((s_len, db), jnp.float32)],
        compiler_params=_compiler_params(("parallel", "parallel"), live),
    )(z, w_bd, b_full)


# ----------------------------------------------------------------------------
# Module forward — all inter-kernel layout changes are free reshapes
# ----------------------------------------------------------------------------

def multi_head_conv1d_forward(x, params, num_heads):
    """x: (B, S, d_model) -> (B, S, d_model)."""
    bsz, s_len, d_model = x.shape

    # x.permute(0, 2, 1): rows (b, d), columns s for the W_x linear.
    xt = jnp.transpose(x, (0, 2, 1)).reshape(bsz * d_model, s_len)

    y = linear_pallas(xt, params["wx"], params["bx"])          # (B*D, S)

    # split_head + batch_combine are row-major reinterpretations of the
    # (B, D, S) buffer as (B, S, H, d_k); with the conv on the channels-last
    # (B, S, D) layout these become free reshapes (no relayout HBM passes).
    z = y.reshape(bsz, s_len, d_model)

    c = conv1d_heads_pallas(z, params["cw"], params["cb"], num_heads)

    # batch_split + combine_heads: pure reinterpretation back to (B*D, S).
    u = c.reshape(bsz * d_model, s_len)

    o = linear_pallas(u, params["wo"], params["bo"])           # (B*D, S)
    return jnp.transpose(o.reshape(bsz, d_model, s_len), (0, 2, 1))


# ----------------------------------------------------------------------------
# Pure-JAX reference (follows the PyTorch module verbatim)
# ----------------------------------------------------------------------------

def _reference(x, params, num_heads):
    b, s, d = x.shape
    h = num_heads
    dk = d // h
    k = params["cw"].shape[-1]
    pad = (k - 1) // 2

    y = jnp.transpose(x, (0, 2, 1))                            # (B, D, S)
    y = y @ params["wx"].T + params["bx"]
    y = y.reshape(b, s, h, dk).transpose(0, 2, 1, 3)           # split_head
    y = y.transpose(0, 1, 3, 2).reshape(b * h, dk, s)          # batch_combine
    y = jax.lax.conv_general_dilated(
        y, params["cw"], window_strides=(1,), padding=[(pad, pad)],
        dimension_numbers=("NCH", "OIH", "NCH"),
    ) + params["cb"].reshape(1, dk, 1)
    y = y.reshape(b, h, dk, s).transpose(0, 1, 3, 2)           # batch_split
    y = y.transpose(0, 2, 1, 3).reshape(b, d, s)               # combine_heads
    y = y @ params["wo"].T + params["bo"]
    return jnp.transpose(y, (0, 2, 1))


# ----------------------------------------------------------------------------
# Main
# ----------------------------------------------------------------------------

if __name__ == "__main__":
    batch = 2
    d_model = 8
    num_heads = 2
    d_k = d_model // num_heads
    seq_length = 16
    kernel_size = 3
    assert kernel_size % 2 == 1

    key = jax.random.PRNGKey(0)
    k_x, k_wx, k_bx, k_wo, k_bo, k_cw, k_cb = jax.random.split(key, 7)

    params = {
        "wx": jax.random.normal(k_wx, (seq_length, seq_length), jnp.float32) * 0.1,
        "bx": jax.random.normal(k_bx, (seq_length,), jnp.float32) * 0.1,
        "wo": jax.random.normal(k_wo, (seq_length, seq_length), jnp.float32) * 0.1,
        "bo": jax.random.normal(k_bo, (seq_length,), jnp.float32) * 0.1,
        "cw": jax.random.normal(k_cw, (d_k, d_k, kernel_size), jnp.float32) * 0.1,
        "cb": jax.random.normal(k_cb, (d_k,), jnp.float32) * 0.1,
    }

    x = jax.random.normal(k_x, (batch, seq_length, d_model), jnp.float32)

    out = jax.block_until_ready(multi_head_conv1d_forward(x, params, num_heads))
    ref = jax.block_until_ready(_reference(x, params, num_heads))

    assert out.shape == (batch, seq_length, d_model), out.shape
    err = float(jnp.max(jnp.abs(out - ref)))
    assert err < 1e-4, err
    print("KERNEL_OK")
</pallas_src>

<mosaic_0001>
module attributes {stable_mosaic.version = 11 : i64} {
  func.func @_linear_kernel(%arg0: i32, %arg1: i32, %arg2: i32, %arg3: memref<16x16xf32, #tpu.memory_space<vmem>>, %arg4: memref<16x16xf32, #tpu.memory_space<vmem>>, %arg5: memref<1x16xf32, #tpu.memory_space<vmem>>, %arg6: memref<16x16xf32, #tpu.memory_space<vmem>>, %arg7: memref<16x16xf32, #tpu.memory_space<vmem>>) attributes {dimension_semantics = [#tpu.dimension_semantics<parallel>, #tpu.dimension_semantics<parallel>, #tpu.dimension_semantics<arbitrary>], iteration_bounds = array<i64: 1, 1, 1>, scalar_prefetch = 0 : i64, scratch_operands = 1 : i64, tpu.core_type = #tpu.core_type<tc>, window_params = [{transform_indices = @transform_0, window_bounds = array<i64: 16, 16>}, {transform_indices = @transform_1, window_bounds = array<i64: 16, 16>}, {transform_indices = @transform_2, window_bounds = array<i64: 1, 16>}, {transform_indices = @transform_3, window_bounds = array<i64: 16, 16>}]} {
    %c0_i32 = arith.constant 0 : i32
    %0 = arith.cmpi eq, %arg2, %c0_i32 : i32
    %1 = arith.extui %0 : i1 to i32
    %c0_i32_0 = arith.constant 0 : i32
    %2 = arith.cmpi ne, %1, %c0_i32_0 : i32
    scf.if %2 {
      %cst_10 = arith.constant 0.000000e+00 : f32
      %12 = vector.broadcast %cst_10 : f32 to vector<16x16xf32>
      %c0_11 = arith.constant 0 : index
      %c0_12 = arith.constant 0 : index
      %13 = vector.load %arg7[%c0_11, %c0_12] : memref<16x16xf32, #tpu.memory_space<vmem>>, vector<16x16xf32>
      tpu.vector_store %arg7[%c0_11, %c0_12], %12 {strides = array<i32>} : memref<16x16xf32, #tpu.memory_space<vmem>>, vector<16x16xf32>,
    } else {
    }
    %c0 = arith.constant 0 : index
    %c0_1 = arith.constant 0 : index
    %3 = vector.load %arg7[%c0, %c0_1] : memref<16x16xf32, #tpu.memory_space<vmem>>, vector<16x16xf32>
    %c0_2 = arith.constant 0 : index
    %c0_3 = arith.constant 0 : index
    %4 = vector.load %arg3[%c0_2, %c0_3] : memref<16x16xf32, #tpu.memory_space<vmem>>, vector<16x16xf32>
    %c0_4 = arith.constant 0 : index
    %c0_5 = arith.constant 0 : index
    %5 = vector.load %arg4[%c0_4, %c0_5] : memref<16x16xf32, #tpu.memory_space<vmem>>, vector<16x16xf32>
    %cst = arith.constant dense<0.000000e+00> : vector<16x16xf32>
    %6 = tpu.matmul %4, %5, %cst {dimension_numbers = #tpu.dot_dimension_numbers<[1], [0], [0], [1], [0, 0, 1, 1], [], []>} : vector<16x16xf32>, vector<16x16xf32>, vector<16x16xf32> -> vector<16x16xf32>
    %7 = arith.addf %3, %6 : vector<16x16xf32>
    %c0_6 = arith.constant 0 : index
    %c0_7 = arith.constant 0 : index
    %8 = vector.load %arg7[%c0_6, %c0_7] : memref<16x16xf32, #tpu.memory_space<vmem>>, vector<16x16xf32>
    tpu.vector_store %arg7[%c0_6, %c0_7], %7 {strides = array<i32>} : memref<16x16xf32, #tpu.memory_space<vmem>>, vector<16x16xf32>,
    %c0_i32_8 = arith.constant 0 : i32
    %9 = arith.cmpi eq, %arg2, %c0_i32_8 : i32
    %10 = arith.extui %9 : i1 to i32
    %c0_i32_9 = arith.constant 0 : i32
    %11 = arith.cmpi ne, %10, %c0_i32_9 : i32
    scf.if %11 {
      %c0_10 = arith.constant 0 : index
      %c0_11 = arith.constant 0 : index
      %12 = vector.load %arg7[%c0_10, %c0_11] : memref<16x16xf32, #tpu.memory_space<vmem>>, vector<16x16xf32>
      %c0_12 = arith.constant 0 : index
      %c0_13 = arith.constant 0 : index
      %13 = vector.load %arg5[%c0_12, %c0_13] : memref<1x16xf32, #tpu.memory_space<vmem>>, vector<1x16xf32>
      %14 = vector.broadcast %13 : vector<1x16xf32> to vector<16x16xf32>
      %15 = arith.addf %12, %14 : vector<16x16xf32>
      %c0_14 = arith.constant 0 : index
      %c0_15 = arith.constant 0 : index
      %16 = vector.load %arg6[%c0_14, %c0_15] : memref<16x16xf32, #tpu.memory_space<vmem>>, vector<16x16xf32>
      tpu.vector_store %arg6[%c0_14, %c0_15], %15 {strides = array<i32>} : memref<16x16xf32, #tpu.memory_space<vmem>>, vector<16x16xf32>,
    } else {
    }
    return
  }
  func.func @transform_0(%arg0: i32, %arg1: i32, %arg2: i32) -> (i32, i32) {
    %c0_i32 = arith.constant 0 : i32
    return %arg0, %arg2 : i32, i32
  }
  func.func @transform_1(%arg0: i32, %arg1: i32, %arg2: i32) -> (i32, i32) {
    %c0_i32 = arith.constant 0 : i32
    return %arg2, %arg1 : i32, i32
  }
  func.func @transform_2(%arg0: i32, %arg1: i32, %arg2: i32) -> (i32, i32) {
    %c0_i32 = arith.constant 0 : i32
    %c0_i32_0 = arith.constant 0 : i32
    return %c0_i32, %arg1 : i32, i32
  }
  func.func @transform_3(%arg0: i32, %arg1: i32, %arg2: i32) -> (i32, i32) {
    %c0_i32 = arith.constant 0 : i32
    return %arg0, %arg1 : i32, i32
  }
}

</mosaic_0001>

<llo_original>
// kernel: tpu_custom_call.1
$region0: #{tpu_custom_call.1}
  #allocation0 [shape = 'u32[]', space=smem, size = 0x4, offset = 0x4, fixed_abs, tag = 'smem constant byte address 0x4 - core index']
  #allocation1 [shape = 'u32[144,128]{1,0:T(1,128)}', space=vmem, size = 0x12000, scoped, tag = 'internal scratch']
  #allocation2 [shape = 'f32[16,16]{1,0:T(8,128)}', space=vmem, size = 0x2000, scoped, tag = 'scratch operand']
  %s0 = inlined_call_operand.hbm [shape: f32[16,16], index: 0, kind: input, shape index: {}]
  %s1 = inlined_call_operand.hbm [shape: f32[16,16], index: 1, kind: input, shape index: {}]
  %s2 = inlined_call_operand.vmem [shape: f32[1,16], index: 2, kind: input, shape index: {}]
  %s3 = inlined_call_operand.hbm [shape: f32[16,16], index: 3, kind: output, shape index: {}]
  %s4 = sld [smem:[#allocation0]]
  $region38: #{tpu_custom_call.1} parent=0
    _
  %s6 = ssub.s32 1, %s4
  %s7 = scalar_select 0, %s6, %s4
  $region1: #{tpu_custom_call.1} parent=0
    #allocation3 [shape = 'u8[8192]{0}', space=vmem, size = 0x2000, scoped, tag = 'input window, operand 0, single buffered']
    #allocation4 [shape = 's32[1]{0}', space=sflag, size = 0x4, scoped, tag = 'scoped memory for tpu_custom_call.1']
    #allocation5 [shape = 's32[1]{0}', space=sflag, size = 0x4, scoped, tag = 'scoped memory for tpu_custom_call.1']
    #allocation6 [shape = 'u8[8192]{0}', space=vmem, size = 0x2000, scoped, tag = 'input window, operand 1, single buffered']
    #allocation7 [shape = 's32[1]{0}', space=sflag, size = 0x4, scoped, tag = 'scoped memory for tpu_custom_call.1']
    #allocation8 [shape = 'u8[8192]{0}', space=vmem, size = 0x2000, scoped, tag = 'output window, operand 0, single buffered']
    %8 = vsyncpa [#allocation4], 0
    %9 = vsyncpa [#allocation7], 0
    %10 = vsyncpa [#allocation5], 0
    // Predicated region
    $region2: #{tpu_custom_call.1} parent=1 // pred_check
      _
    $region3: #{tpu_custom_call.1} parent=1 // pred_check_branch
      %12 = sbr.rel (0) target = $region5
    $region4: #{tpu_custom_call.1} parent=1 // pred_region
      %s14 = ssub.s32 256, 256
      %15 = vsyncadd [#allocation4], %s14
      %s16 = sshll.u32 [#allocation3], 4
      %s17 = int_to_ptr.vmem [resolvable:$true] %s16
      %22 = dma.hbm_to_vmem [thread:$0]  %s0, 256, %s17, [#allocation4], 128, 128, 8
    $region5: #{tpu_custom_call.1} parent=1 // pred_fallthru
      _
    // Predicated region
    $region6: #{tpu_custom_call.1} parent=1 // pred_check
      _
    $region7: #{tpu_custom_call.1} parent=1 // pred_check_branch
      %24 = sbr.rel (0) target = $region9
    $region8: #{tpu_custom_call.1} parent=1 // pred_region
      %s26 = ssub.s32 256, 256
      %27 = vsyncadd [#allocation7], %s26
      %s28 = sshll.u32 [#allocation6], 4
      %s29 = int_to_ptr.vmem [resolvable:$true] %s28
      %34 = dma.hbm_to_vmem [thread:$0]  %s1, 256, %s29, [#allocation7], 128, 128, 8
    $region9: #{tpu_custom_call.1} parent=1 // pred_fallthru
      _
    // Predicated region
    $region10: #{tpu_custom_call.1} parent=1 // pred_check
      _
    $region11: #{tpu_custom_call.1} parent=1 // pred_check_branch
      %36 = sbr.rel (0) target = $region13
    $region12: #{tpu_custom_call.1} parent=1 // pred_region
      _
    $region13: #{tpu_custom_call.1} parent=1 // pred_fallthru
      _
    // Predicated region
    $region14: #{tpu_custom_call.1} parent=1 // pred_check
      _
    $region15: #{tpu_custom_call.1} parent=1 // pred_check_branch
      %38 = sbr.rel (0) target = $region17
    $region16: #{tpu_custom_call.1} parent=1 // pred_region
      %39 = dma.done [#allocation4], 256
    $region17: #{tpu_custom_call.1} parent=1 // pred_fallthru
      _
    // Predicated region
    $region18: #{tpu_custom_call.1} parent=1 // pred_check
      _
    $region19: #{tpu_custom_call.1} parent=1 // pred_check_branch
      %41 = sbr.rel (0) target = $region21
    $region20: #{tpu_custom_call.1} parent=1 // pred_region
      %42 = dma.done [#allocation7], 256
    $region21: #{tpu_custom_call.1} parent=1 // pred_fallthru
      _
    %p43 = scmp.eq.s32.totalorder 0, 0
    // Predicated region
    $region22: #{tpu_custom_call.1} parent=1 // pred_check
      %p44 = pneg %p43
    $region23: #{tpu_custom_call.1} parent=1 // pred_check_branch
      %46 = sbr.rel (%p44) target = $region25
    $region24: #{tpu_custom_call.1} parent=1 // pred_region
      %vm47 = vcmask 130048
      %48 = vst.msk [vmem:[#allocation2] sm:$0xff] %vm47, 0.0
      %49 = vst.msk [vmem:[#allocation2 + $0x8] sm:$0xff] %vm47, 0.0
    $region25: #{tpu_custom_call.1} parent=1 // pred_fallthru
      _
    %v50 = vld [vmem:[#allocation2] sm:$0xff]
    %v51 = vld [vmem:[#allocation2 + $0x8] sm:$0xff]
    %v52 = vld [vmem:[#allocation3] sm:$0xff]
    %v53 = vld [vmem:[#allocation3 + $0x8] sm:$0xff]
    %v54 = vld [vmem:[#allocation6] sm:$0xff]
    %v55 = vld [vmem:[#allocation6 + $0x8] sm:$0xff]
    %vm56 = vcmask 130048
    %v58 = vsel %vm56, %v52, 0
    %v61 = vsel %vm56, %v53, 0
    %63 = vmatprep.subr.mxu0 0.0
    %64 = vmatpush1.msra.mxu0 0.0
    %65 = vmatprep.subr.mxu0 0.0
    %66 = vmatpush1.msra.mxu0 0.0
    %67 = vmatprep.subr.mxu0 0.0
    %68 = vmatpush1.msra.mxu0 0.0
    %69 = vmatprep.subr.mxu0 0.0
    %70 = vmatpush1.msra.mxu0 0.0
    %71 = vmatprep.subr.mxu0 0.0
    %72 = vmatpush1.msra.mxu0 0.0
    %73 = vmatprep.subr.mxu0 0.0
    %74 = vmatpush1.msra.mxu0 0.0
    %75 = vmatprep.subr.mxu0 0.0
    %76 = vmatpush1.msra.mxu0 0.0
    %77 = vmatprep.subr.mxu0 0.0
    %78 = vmatpush1.msra.mxu0 0.0
    %79 = vmatprep.subr.mxu0 0.0
    %80 = vmatpush1.msra.mxu0 0.0
    %81 = vmatprep.subr.mxu0 0.0
    %82 = vmatpush1.msra.mxu0 0.0
    %83 = vmatprep.subr.mxu0 0.0
    %84 = vmatpush1.msra.mxu0 0.0
    %85 = vmatprep.subr.mxu0 0.0
    %86 = vmatpush1.msra.mxu0 0.0
    %87 = vmatprep.subr.mxu0 0.0
    %88 = vmatpush1.msra.mxu0 0.0
    %89 = vmatprep.subr.mxu0 0.0
    %90 = vmatpush1.msra.mxu0 0.0
    %91 = vmatprep.subr.mxu0 0.0
    %92 = vmatpush1.msra.mxu0 %v55
    %93 = vmatprep.subr.mxu0 0.0
    %94 = vmatpush1.msra.mxu0 %v54
    %95 = vmatprep.subr.mxu0 0.0
    %96 = vmatpush2.msra.mxu0 0.0
    %97 = vmatprep.subr.mxu0 0.0
    %98 = vmatpush2.msra.mxu0 0.0
    %99 = vmatprep.subr.mxu0 0.0
    %100 = vmatpush2.msra.mxu0 0.0
    %101 = vmatprep.subr.mxu0 0.0
    %102 = vmatpush2.msra.mxu0 0.0
    %103 = vmatprep.subr.mxu0 0.0
    %104 = vmatpush2.msra.mxu0 0.0
    %105 = vmatprep.subr.mxu0 0.0
    %106 = vmatpush2.msra.mxu0 0.0
    %107 = vmatprep.subr.mxu0 0.0
    %108 = vmatpush2.msra.mxu0 0.0
    %109 = vmatprep.subr.mxu0 0.0
    %110 = vmatpush2.msra.mxu0 0.0
    %111 = vmatprep.subr.mxu0 0.0
    %112 = vmatpush2.msra.mxu0 0.0
    %113 = vmatprep.subr.mxu0 0.0
    %114 = vmatpush2.msra.mxu0 0.0
    %115 = vmatprep.subr.mxu0 0.0
    %116 = vmatpush2.msra.mxu0 0.0
    %117 = vmatprep.subr.mxu0 0.0
    %118 = vmatpush2.msra.mxu0 0.0
    %119 = vmatprep.subr.mxu0 0.0
    %120 = vmatpush2.msra.mxu0 0.0
    %121 = vmatprep.subr.mxu0 0.0
    %122 = vmatpush2.msra.mxu0 0.0
    %123 = vmatprep.subr.mxu0 0.0
    %124 = vmatpush2.msra.mxu0 0.0
    %125 = vmatprep.subr.mxu0 0.0
    %126 = vmatpush2.msra.mxu0 0.0
    %127 = vmatprep.mubr.f32.mxu0 0.0
    %128 = vmatmul.mubr.f32.gmra.mxu0 %v58
    %v129 = vpop.f32.mrf.mxu0
    %v130 = vadd.f32 0.0, %v129
    %v131 = vpop.f32.mrf.mxu0
    %132 = vmatprep.mubr.f32.mxu0 0.0
    %133 = vmatmul.mubr.f32.gmra.mxu0 %v61
    %v134 = vpop.f32.mrf.mxu0
    %v135 = vadd.f32 0.0, %v134
    %v136 = vpop.f32.mrf.mxu0
    %137 = vdwg.mxu0
    %v138 = vadd.f32 %v50, %v130
    %v139 = vadd.f32 %v51, %v135
    %140 = vst.msk [vmem:[#allocation2] sm:$0xff] %vm56, %v138
    %141 = vst.msk [vmem:[#allocation2 + $0x8] sm:$0xff] %vm56, %v139
    // Predicated region
    $region26: #{tpu_custom_call.1} parent=1 // pred_check
      %p142 = pneg %p43
    $region27: #{tpu_custom_call.1} parent=1 // pred_check_branch
      %144 = sbr.rel (%p142) target = $region29
    $region28: #{tpu_custom_call.1} parent=1 // pred_region
      %v145 = vld [vmem:[#allocation2] sm:$0xff]
      %v146 = vld [vmem:[#allocation2 + $0x8] sm:$0xff]
      %v147 = vld [vmem:[%s2] sm:$0x1]
      %v149 = vlaneseq
      %v150 = vshrl.u32 %v149, 7
      %v151 = vsub.s32 0, %v150
      %v152 = vrot.slane %v147, %v151
      %v154 = vadd.f32 %v145, %v152
      %v155 = vadd.f32 %v146, %v152
      %156 = vst.msk [vmem:[#allocation8] sm:$0xff] %vm56, %v154
      %157 = vst.msk [vmem:[#allocation8 + $0x8] sm:$0xff] %vm56, %v155
    $region29: #{tpu_custom_call.1} parent=1 // pred_fallthru
      _
    // Predicated region
    $region30: #{tpu_custom_call.1} parent=1 // pred_check
      _
    $region31: #{tpu_custom_call.1} parent=1 // pred_check_branch
      %159 = sbr.rel (0) target = $region33
    $region32: #{tpu_custom_call.1} parent=1 // pred_region
      %s161 = ssub.s32 256, 256
      %162 = vsyncadd [#allocation5], %s161
      %s163 = sshll.u32 [#allocation8], 4
      %s164 = int_to_ptr.vmem [resolvable:$true] %s163
      %169 = dma.vmem_to_hbm [thread:$0]  %s164, 256, %s3, [#allocation5], 128, 128, 8
    $region33: #{tpu_custom_call.1} parent=1 // pred_fallthru
      _
    // Predicated region
    $region34: #{tpu_custom_call.1} parent=1 // pred_check
      _
    $region35: #{tpu_custom_call.1} parent=1 // pred_check_branch
      %171 = sbr.rel (0) target = $region37
    $region36: #{tpu_custom_call.1} parent=1 // pred_region
      %172 = dma.done [#allocation5], 256
    $region37: #{tpu_custom_call.1} parent=1 // pred_fallthru
      _
    %173 = vsyncpa [#allocation4], 1
    %174 = vsyncpa [#allocation7], 1
    %175 = vsyncpa [#allocation5], 1

</llo_original>
